<compile_context>
chip_gen: v6e
topology: v6e:2x2x1
jax: 0.10.0
libtpu: 0.0.40
codegen_flags: <defaults>
</compile_context>

<pallas_src>
import functools

import jax
import jax.numpy as jnp
from jax import lax
from jax.experimental import pallas as pl
from jax.experimental.pallas import tpu as pltpu

_MAX_BLOCK_BYTES = 4 * 1024 * 1024     # keeps 2x(in)+2x(out) buffers small
_VMEM_LIMIT_BYTES = 32 * 1024 * 1024   # safe on v5e (16 MiB default) and v7x


def _half_swap(x, axis):
    """cat(x[mid:], x[:mid]) along `axis` — the CutPerm half permutation."""
    n = x.shape[axis]
    mid = n // 2
    hi = lax.slice_in_dim(x, mid, n, axis=axis)
    lo = lax.slice_in_dim(x, 0, mid, axis=axis)
    # For even n this equals pltpu.roll(x, n - mid, axis); static slices +
    # concatenate are used for lowering robustness, and the swap is pl.when /
    # Python gated so it only runs when actually needed.
    return jnp.concatenate([hi, lo], axis=axis)


def _batch_tile(batch, per_sample_bytes):
    """Largest divisor of batch keeping the block under _MAX_BLOCK_BYTES."""
    tb = 1
    for d in range(1, batch + 1):
        if batch % d == 0 and d * per_sample_bytes <= _MAX_BLOCK_BYTES:
            tb = d
    return tb


def _cost(x):
    nbytes = x.size * x.dtype.itemsize
    # Purely memory bound: read once + write once.
    return pl.CostEstimate(flops=x.size, transcendentals=0,
                           bytes_accessed=2 * nbytes)


@functools.partial(jax.jit, static_argnums=(1, 2))
def _cutperm_static(x, jig_h, jig_v):
    """Deterministic path: out = cutperm(x) with the jigsaw bits static."""
    B, C, H, W = x.shape
    # H half-swap can move into the index_map only if H//2 obeys the sublane
    # (8) rule; otherwise fall back to an in-kernel (static) swap.
    split_h = (H % 2 == 0) and ((H // 2) % 8 == 0)
    h_blk = H // 2 if split_h else H
    tb = _batch_tile(B, C * h_blk * W * x.dtype.itemsize)
    block = (tb, C, h_blk, W)
    # Note: for very large per-sample C*H*W an extra C-tiling grid axis would
    # be needed to stay inside v7x's 64 MiB VMEM; unnecessary at these sizes.

    def kernel(x_ref, o_ref):
        y = x_ref[...]
        if (not split_h) and jig_h == 1:
            y = _half_swap(y, 2)
        if jig_v == 1:
            y = _half_swap(y, 3)
        o_ref[...] = y

    if split_h:
        grid = (B // tb, 2)
        in_spec = pl.BlockSpec(block, lambda b, h: (b, 0, (h + jig_h) % 2, 0))
        out_spec = pl.BlockSpec(block, lambda b, h: (b, 0, h, 0))
    else:
        grid = (B // tb,)
        in_spec = pl.BlockSpec(block, lambda b: (b, 0, 0, 0))
        out_spec = pl.BlockSpec(block, lambda b: (b, 0, 0, 0))

    return pl.pallas_call(
        kernel,
        out_shape=jax.ShapeDtypeStruct(x.shape, x.dtype),
        grid=grid,
        in_specs=[in_spec],
        out_specs=out_spec,
        compiler_params=pltpu.CompilerParams(
            dimension_semantics=("parallel",) * len(grid),
            vmem_limit_bytes=_VMEM_LIMIT_BYTES),
        cost_estimate=_cost(x),
    )(x)


@functools.partial(jax.jit, static_argnums=(1, 2))
def _cutperm_masked(x, jig_h, jig_v, keep):
    """Random path: out[b] = x[b] if keep[b] == 1 else cutperm(x[b])."""
    B, C, H, W = x.shape
    split_h = (H % 2 == 0) and ((H // 2) % 8 == 0)
    h_blk = H // 2 if split_h else H
    block = (1, C, h_blk, W)

    def kernel(keep_ref, x_ref, o_ref):
        b = pl.program_id(0)
        keep_b = keep_ref[b]

        @pl.when(keep_b == 1)
        def _():
            # Index_map already delivered the un-swapped block for kept samples.
            o_ref[...] = x_ref[...]

        @pl.when(keep_b == 0)
        def _():
            y = x_ref[...]
            if (not split_h) and jig_h == 1:
                y = _half_swap(y, 2)
            if jig_v == 1:
                y = _half_swap(y, 3)
            o_ref[...] = y

    if split_h:
        grid = (B, 2)
        if jig_h == 1:
            # DMA reads the swapped H-half only for samples with keep == 0.
            x_map = lambda b, h, keep_ref: (b, 0, (h + (1 - keep_ref[b])) % 2, 0)
        else:
            x_map = lambda b, h, keep_ref: (b, 0, h, 0)
        o_map = lambda b, h, keep_ref: (b, 0, h, 0)
    else:
        grid = (B,)
        x_map = lambda b, keep_ref: (b, 0, 0, 0)
        o_map = lambda b, keep_ref: (b, 0, 0, 0)

    grid_spec = pltpu.PrefetchScalarGridSpec(
        num_scalar_prefetch=1,
        grid=grid,
        in_specs=[pl.BlockSpec(block, x_map)],
        out_specs=pl.BlockSpec(block, o_map),
    )
    return pl.pallas_call(
        kernel,
        out_shape=jax.ShapeDtypeStruct(x.shape, x.dtype),
        grid_spec=grid_spec,
        compiler_params=pltpu.CompilerParams(
            dimension_semantics=("parallel",) * len(grid),
            vmem_limit_bytes=_VMEM_LIMIT_BYTES),
        cost_estimate=_cost(x),
    )(keep, x)


def cutperm(x, aug_index=None, *, key=None, max_range=4, prob=0.5):
    """JAX/Pallas equivalent of CutPerm.forward (NCHW input)."""
    B = x.shape[0]
    if aug_index is None:
        if key is None:
            key = jax.random.PRNGKey(0)
        k_aug, k_mask = jax.random.split(key)
        # The reference samples aug_index host-side (np.random.randint); mirror
        # that by pulling the draw to host so the jigsaw bits stay static.
        aug = int(jax.random.randint(k_aug, (), 0, 4))
        jig_h = int((aug // 2) == 1)
        jig_v = int((aug % 2) == 1)
        if jig_h == 0 and jig_v == 0:
            return x  # mask*x + (1-mask)*x == x
        # bernoulli mask is exactly {0,1}: keep[b]==1 -> keep original sample.
        keep = jax.random.bernoulli(k_mask, prob, (B,)).astype(jnp.int32)
        return _cutperm_masked(x, jig_h, jig_v, keep)

    aug = aug_index % max_range
    jig_h = int((aug // 2) == 1)
    jig_v = int((aug % 2) == 1)
    if jig_h == 0 and jig_v == 0:
        return x  # identity permutation
    return _cutperm_static(x, jig_h, jig_v)


def _cutperm_ref(x, aug_index):
    """Pure-JAX reference of CutPerm._cutperm for verification."""
    _, _, H, W = x.shape
    h_mid, w_mid = H // 2, W // 2
    jig_h, jig_v = aug_index // 2, aug_index % 2
    y = x
    if jig_h == 1:
        y = jnp.concatenate([y[:, :, h_mid:, :], y[:, :, :h_mid, :]], axis=2)
    if jig_v == 1:
        y = jnp.concatenate([y[:, :, :, w_mid:], y[:, :, :, :w_mid]], axis=3)
    return y


if __name__ == "__main__":
    key = jax.random.PRNGKey(0)
    kx, kmod = jax.random.split(key)
    x = jax.random.normal(kx, (2, 4, 16, 16), dtype=jnp.float32)

    ok = True

    # Deterministic path: check all 4 aug indices against the reference.
    for ai in range(4):
        out = jax.block_until_ready(cutperm(x, aug_index=ai))
        ref = _cutperm_ref(x, ai)
        ok &= bool(jnp.allclose(out, ref))
        ok &= (out.shape == x.shape) and (out.dtype == x.dtype)

    # Random path: every sample must equal either the input or one of the four
    # cutperm variants (the bernoulli mask is a per-sample {0,1} select).
    out_rand = jax.block_until_ready(cutperm(x, aug_index=None, key=kmod))
    ok &= (out_rand.shape == x.shape) and (out_rand.dtype == x.dtype)
    candidates = [x] + [_cutperm_ref(x, ai) for ai in range(4)]
    for b in range(x.shape[0]):
        ok &= any(bool(jnp.allclose(out_rand[b], c[b])) for c in candidates)

    if ok:
        print("KERNEL_OK")
    else:
        print("KERNEL_MISMATCH")
</pallas_src>

<mosaic_0001>
module attributes {stable_mosaic.version = 11 : i64} {
  func.func @kernel(%arg0: i32, %arg1: i32, %arg2: memref<2x4x8x16xf32, #tpu.memory_space<vmem>>, %arg3: memref<2x4x8x16xf32, #tpu.memory_space<vmem>>) attributes {dimension_semantics = [#tpu.dimension_semantics<parallel>, #tpu.dimension_semantics<parallel>], iteration_bounds = array<i64: 1, 2>, scalar_prefetch = 0 : i64, scratch_operands = 0 : i64, tpu.core_type = #tpu.core_type<tc>, window_params = [{transform_indices = @transform_0, window_bounds = array<i64: 2, 4, 8, 16>}, {transform_indices = @transform_1, window_bounds = array<i64: 2, 4, 8, 16>}]} {
    %c0 = arith.constant 0 : index
    %c0_0 = arith.constant 0 : index
    %c0_1 = arith.constant 0 : index
    %c0_2 = arith.constant 0 : index
    %0 = vector.load %arg2[%c0, %c0_0, %c0_1, %c0_2] : memref<2x4x8x16xf32, #tpu.memory_space<vmem>>, vector<2x4x8x16xf32>
    %1 = vector.extract_strided_slice %0 {offsets = [0, 0, 0, 8], sizes = [2, 4, 8, 8], strides = [1, 1, 1, 1]} : vector<2x4x8x16xf32> to vector<2x4x8x8xf32>
    %2 = vector.extract_strided_slice %0 {offsets = [0, 0, 0, 0], sizes = [2, 4, 8, 8], strides = [1, 1, 1, 1]} : vector<2x4x8x16xf32> to vector<2x4x8x8xf32>
    %3 = tpu.concatenate %1, %2 in 3 : vector<2x4x8x8xf32>, vector<2x4x8x8xf32> -> vector<2x4x8x16xf32>
    %c0_3 = arith.constant 0 : index
    %c0_4 = arith.constant 0 : index
    %c0_5 = arith.constant 0 : index
    %c0_6 = arith.constant 0 : index
    %4 = vector.load %arg3[%c0_3, %c0_4, %c0_5, %c0_6] : memref<2x4x8x16xf32, #tpu.memory_space<vmem>>, vector<2x4x8x16xf32>
    tpu.vector_store %arg3[%c0_3, %c0_4, %c0_5, %c0_6], %3 {strides = array<i32>} : memref<2x4x8x16xf32, #tpu.memory_space<vmem>>, vector<2x4x8x16xf32>,
    return
  }
  func.func @transform_0(%arg0: i32, %arg1: i32) -> (i32, i32, i32, i32) {
    %c0_i32 = arith.constant 0 : i32
    %0 = arith.addi %arg1, %c0_i32 : i32
    %c2_i32 = arith.constant 2 : i32
    %c0_i32_0 = arith.constant 0 : i32
    %1 = arith.cmpi eq, %c2_i32, %c0_i32_0 : i32
    %c1_i32 = arith.constant 1 : i32
    %2 = arith.select %1, %c1_i32, %c2_i32 : i32
    %3 = arith.remsi %0, %2 : i32
    %c0_i32_1 = arith.constant 0 : i32
    %4 = arith.cmpi ne, %3, %c0_i32_1 : i32
    %c0_i32_2 = arith.constant 0 : i32
    %5 = arith.cmpi slt, %3, %c0_i32_2 : i32
    %c0_i32_3 = arith.constant 0 : i32
    %6 = arith.cmpi slt, %2, %c0_i32_3 : i32
    %7 = arith.xori %5, %6 : i1
    %8 = arith.andi %7, %4 : i1
    %9 = arith.addi %3, %2 : i32
    %10 = arith.select %8, %9, %3 : i32
    %c0_i32_4 = arith.constant 0 : i32
    %c0_i32_5 = arith.constant 0 : i32
    %c0_i32_6 = arith.constant 0 : i32
    return %arg0, %c0_i32_4, %10, %c0_i32_5 : i32, i32, i32, i32
  }
  func.func @transform_1(%arg0: i32, %arg1: i32) -> (i32, i32, i32, i32) {
    %c0_i32 = arith.constant 0 : i32
    %c0_i32_0 = arith.constant 0 : i32
    %c0_i32_1 = arith.constant 0 : i32
    return %arg0, %c0_i32, %arg1, %c0_i32_0 : i32, i32, i32, i32
  }
}

</mosaic_0001>

<llo_original>
// kernel: _cutperm_static.1
$region0: #{_cutperm_static.1}
  #allocation0 [shape = 'u32[]', space=smem, size = 0x4, offset = 0x4, fixed_abs, tag = 'smem constant byte address 0x4 - core index']
  #allocation1 [shape = 'u32[144,128]{1,0:T(1,128)}', space=vmem, size = 0x12000, scoped, tag = 'internal scratch']
  %s0 = inlined_call_operand.hbm [shape: f32[2,4,16,16], index: 0, kind: input, shape index: {}]
  %s1 = inlined_call_operand.hbm [shape: f32[2,4,16,16], index: 1, kind: output, shape index: {}]
  %s2 = sld [smem:[#allocation0]]
  $region41: #{_cutperm_static.1} parent=0
    _
  %s4 = ssub.s32 1, %s2
  %s5 = scalar_select 0, %s4, %s2
  $region1: #{_cutperm_static.1} parent=0
    #allocation2 [shape = 'u8[65536]{0}', space=vmem, size = 0x10000, scoped, tag = 'input window, operand 0']
    #allocation3 [shape = 's32[2]{0}', space=sflag, size = 0x8, scoped, tag = 'scoped memory for _cutperm_static.1']
    #allocation4 [shape = 's32[2]{0}', space=sflag, size = 0x8, scoped, tag = 'scoped memory for _cutperm_static.1']
    #allocation5 [shape = 'u8[65536]{0}', space=vmem, size = 0x10000, scoped, tag = 'output window, operand 0']
    %6 = vsyncpa [#allocation3], 0
    %s7 = scalar_lea.sflag [#allocation3], 1
    %8 = vsyncpa %s7, 0
    %9 = vsyncpa [#allocation4], 0
    %s10 = scalar_lea.sflag [#allocation4], 1
    %11 = vsyncpa %s10, 0
    loop: start=0, step=1, limit=4
    $region2: #{_cutperm_static.1} parent=1 // loop_pre_header
      _
    $region3: #{_cutperm_static.1} parent=1 // loop_header
      %s13 = sphi 0, %s17
      %p14 = scmp.ge.s32.totalorder %s13, 4
      %s20 = sphi 0, %s32
      %s21 = sphi 0, %s28
      %s22 = sphi 0, %s20
      %s23 = sphi 0, %s21
      %s24 = sphi 0, %s22
      %s25 = sphi 0, %s23
      %s61 = sphi 0, %s63
      %s64 = sphi 0, %s61
      %s65 = sphi 0, %s64
      %s81 = sphi 0, %s65
      %s89 = sphi 0, %s91
      %s92 = sphi 0, %s89
      %s93 = sphi 0, %s92
      %s109 = sphi 0, %s93
    $region4: #{_cutperm_static.1} parent=1 // loop_header_branch
      %16 = sbr.rel (%p14) target = $region8
    $region5: #{_cutperm_static.1} parent=1 // loop_body
      %s18 = ssub.s32 %s13, 1
      %s19 = ssub.s32 %s13, 2
      %s26 = sadd.s32 1, %s21
      %p27 = scmp.ge.s32.totalorder %s26, 2
      %s28 = scalar_select %p27, 0, %s26
      %s29 = sadd.s32 1, %s20
      %s30 = scalar_select %p27, %s29, %s20
      %p31 = scmp.ge.s32.totalorder %s30, 1
      %s32 = scalar_select %p31, 0, %s30
      %p33 = scmp.lt.s32.totalorder %s21, 0
      %s34 = ssub.s32 0, %s21
      %s35 = scalar_select %p33, %s34, %s21
      %s36 = sand.u32 %s35, 1
      %s37 = ssub.s32 0, %s36
      %s38 = scalar_select %p33, %s37, %s36
      %p39 = scmp.ne.s32.totalorder %s38, 0
      %p40 = scmp.lt.s32.totalorder %s38, 0
      %p41 = pnand %p40, %p39
      %p42 = pneg %p41
      %s43 = sadd.s32 %s38, 2
      %s44 = scalar_select %p42, %s43, %s38
      %p45 = scmp.lt.s32.totalorder %s28, 0
      %s46 = ssub.s32 0, %s28
      %s47 = scalar_select %p45, %s46, %s28
      %s48 = sand.u32 %s47, 1
      %s49 = ssub.s32 0, %s48
      %s50 = scalar_select %p45, %s49, %s48
      %p51 = scmp.ne.s32.totalorder %s50, 0
      %p52 = scmp.lt.s32.totalorder %s50, 0
      %p53 = pnand %p52, %p51
      %p54 = pneg %p53
      %s55 = sadd.s32 %s50, 2
      %s56 = scalar_select %p54, %s55, %s50
      %s57 = ssub.s32 %s20, %s32
      %s58 = ssub.s32 %s44, %s56
      %s59 = sor.u32 %s57, %s58
      %p60 = scmp.eq.s32.totalorder %s59, 0
      %s62 = sadd.s32 %s61, 1
      %s63 = scalar_select %p60, %s61, %s62
      %p66 = pneg %p60
      %p67 = scmp.eq.s32.totalorder %s13, 1
      %p68 = por %p66, %p67
      %p69 = scmp.ne.s32.totalorder %s61, %s64
      %p70 = scmp.eq.s32.totalorder %s13, 0
      %p71 = por %p69, %p70
      %p72 = scmp.ne.s32.totalorder %s61, %s64
      %p73 = scmp.eq.s32.totalorder %s18, 1
      %p74 = por %p72, %p73
      %p75 = scmp.ne.s32.totalorder %s64, %s65
      %p76 = scmp.eq.s32.totalorder %s18, 0
      %p77 = por %p75, %p76
      %p78 = scmp.ne.s32.totalorder %s64, %s65
      %p79 = scmp.eq.s32.totalorder %s19, 1
      %p80 = por %p78, %p79
      %p82 = scmp.ne.s32.totalorder %s65, %s81
      %p83 = scmp.eq.s32.totalorder %s19, 0
      %p84 = por %p82, %p83
      %s85 = ssub.s32 %s20, %s32
      %s86 = ssub.s32 %s21, %s28
      %s87 = sor.u32 %s85, %s86
      %p88 = scmp.eq.s32.totalorder %s87, 0
      %s90 = sadd.s32 %s89, 1
      %s91 = scalar_select %p88, %s89, %s90
      %p94 = pneg %p88
      %p95 = scmp.eq.s32.totalorder %s13, 1
      %p96 = por %p94, %p95
      %p97 = scmp.ne.s32.totalorder %s89, %s92
      %p98 = scmp.eq.s32.totalorder %s13, 0
      %p99 = por %p97, %p98
      %p100 = scmp.ne.s32.totalorder %s89, %s92
      %p101 = scmp.eq.s32.totalorder %s18, 1
      %p102 = por %p100, %p101
      %p103 = scmp.ne.s32.totalorder %s92, %s93
      %p104 = scmp.eq.s32.totalorder %s18, 0
      %p105 = por %p103, %p104
      %p106 = scmp.ne.s32.totalorder %s92, %s93
      %p107 = scmp.eq.s32.totalorder %s19, 1
      %p108 = por %p106, %p107
      %p110 = scmp.ne.s32.totalorder %s93, %s109
      %p111 = scmp.eq.s32.totalorder %s19, 0
      %p112 = por %p110, %p111
      %p113 = scmp.le.s32.totalorder 1, %s13
      %p114 = scmp.lt.s32.totalorder %s13, 3
      %p115 = pnand %p113, %p114
      %p116 = pneg %p115
      // Predicated region
      $region9: #{_cutperm_static.1} parent=5 // pred_check
        _
      $region10: #{_cutperm_static.1} parent=5 // pred_check_branch
        %118 = sbr.rel (%p115) target = $region12
      $region11: #{_cutperm_static.1} parent=5 // pred_region
        %s119 = ssub.s32 %s13, 1
      $region12: #{_cutperm_static.1} parent=5 // pred_fallthru
        _
      %p120 = scmp.lt.s32.totalorder %s13, 2
      // Predicated region
      $region13: #{_cutperm_static.1} parent=5 // pred_check
        %p121 = pneg %p120
      $region14: #{_cutperm_static.1} parent=5 // pred_check_branch
        %123 = sbr.rel (%p121) target = $region16
      $region15: #{_cutperm_static.1} parent=5 // pred_region
        // Predicated region
        $region17: #{_cutperm_static.1} parent=15 // pred_check
          %p124 = pneg %p71
        $region18: #{_cutperm_static.1} parent=15 // pred_check_branch
          %126 = sbr.rel (%p124) target = $region20
        $region19: #{_cutperm_static.1} parent=15 // pred_region
          %s127 = sand.u32 %s61, 1
          %s128 = scalar_lea.sflag [#allocation3], %s127
          %s129 = sand.u32 %s61, 1
          %s130 = smul.addr %s129, 64
          %s131 = scalar_lea.vmem [#allocation2], %s130
          %p132 = scmp.lt.s32.totalorder %s21, 0
          %s133 = ssub.s32 0, %s21
          %s134 = scalar_select %p132, %s133, %s21
          %s135 = sand.u32 %s134, 1
          %s136 = ssub.s32 0, %s135
          %s137 = scalar_select %p132, %s136, %s135
          %p138 = scmp.ne.s32.totalorder %s137, 0
          %p139 = scmp.lt.s32.totalorder %s137, 0
          %p140 = pnand %p139, %p138
          %p141 = pneg %p140
          %s142 = sadd.s32 %s137, 2
          %s143 = scalar_select %p141, %s142, %s137
          %s144 = smul.u32 2, %s20
          %s146 = ssub.s32 1024, 1024
          %147 = vsyncadd %s128, %s146
          %s148 = smul.addr %s144, 8
          %s149 = sadd.s32 %s143, %s148
          %s150 = smul.addr %s149, 128
          %s151 = scalar_lea.hbm %s0, %s150
          %s152 = sshll.u32 %s131, 4
          %s153 = int_to_ptr.vmem [resolvable:$true] %s152
          %158 = dma.hbm_to_vmem [thread:$0]  %s151, 1024, %s153, %s128, 256, 128, 8
        $region20: #{_cutperm_static.1} parent=15 // pred_fallthru
          _
      $region16: #{_cutperm_static.1} parent=5 // pred_fallthru
        _
      %p159 = scmp.le.s32.totalorder 1, %s13
      %p160 = scmp.lt.s32.totalorder %s13, 3
      %p161 = pnand %p159, %p160
      %p162 = pneg %p161
      // Predicated region
      $region21: #{_cutperm_static.1} parent=5 // pred_check
        _
      $region22: #{_cutperm_static.1} parent=5 // pred_check_branch
        %164 = sbr.rel (%p161) target = $region24
      $region23: #{_cutperm_static.1} parent=5 // pred_region
        %s165 = ssub.s32 %s13, 1
        %s166 = sand.u32 %s64, 1
        %s167 = scalar_lea.sflag [#allocation3], %s166
        %s168 = sand.u32 %s64, 1
        %s169 = smul.addr %s168, 64
        %s170 = scalar_lea.vmem [#allocation2], %s169
        // Predicated region
        $region25: #{_cutperm_static.1} parent=23 // pred_check
          %p171 = pneg %p77
        $region26: #{_cutperm_static.1} parent=23 // pred_check_branch
          %173 = sbr.rel (%p171) target = $region28
        $region27: #{_cutperm_static.1} parent=23 // pred_region
          %174 = dma.done %s167, 1024
        $region28: #{_cutperm_static.1} parent=23 // pred_fallthru
          _
        %s175 = sand.u32 %s64, 1
        %s176 = scalar_lea.sflag [#allocation3], %s175
        %s177 = sand.u32 %s64, 1
        %s178 = smul.addr %s177, 64
        %s179 = scalar_lea.vmem [#allocation2], %s178
        %p180 = pneg %p77
        %p181 = pneg %p74
        %p182 = pneg %p105
        %p183 = pneg %p102
        %s184 = sand.u32 %s92, 1
        %s185 = scalar_lea.sflag [#allocation4], %s184
        %s186 = sand.u32 %s92, 1
        %s187 = smul.addr %s186, 64
        %s188 = scalar_lea.vmem [#allocation5], %s187
        %p189 = scmp.lt.s32.totalorder %s23, 0
        %s190 = ssub.s32 0, %s23
        %s191 = scalar_select %p189, %s190, %s23
        %s192 = sand.u32 %s191, 1
        %s193 = ssub.s32 0, %s192
        %s194 = scalar_select %p189, %s193, %s192
        %p195 = scmp.ne.s32.totalorder %s194, 0
        %p196 = scmp.lt.s32.totalorder %s194, 0
        %p197 = pnand %p196, %p195
        %p198 = pneg %p197
        %s199 = sadd.s32 %s194, 2
        %s200 = scalar_select %p198, %s199, %s194
        %s201 = smul.u32 2, %s22
        %s202 = smul.u32 2, %s22
        %v203 = vld [vmem:[%s170] sm:$0xff]
        %v204 = vld [vmem:[%s170 + $0x8] sm:$0xff]
        %v205 = vld [vmem:[%s170 + $0x10] sm:$0xff]
        %v206 = vld [vmem:[%s170 + $0x18] sm:$0xff]
        %v207 = vld [vmem:[%s170 + $0x20] sm:$0xff]
        %v208 = vld [vmem:[%s170 + $0x28] sm:$0xff]
        %v209 = vld [vmem:[%s170 + $0x30] sm:$0xff]
        %v210 = vld [vmem:[%s170 + $0x38] sm:$0xff]
        %219 = vrot.lane.b32.xlu0 %v203, 120
        %v220 = vpop.permute.xlu0 %219
        %221 = vrot.lane.b32.xlu0 %v204, 120
        %v222 = vpop.permute.xlu0 %221
        %223 = vrot.lane.b32.xlu0 %v205, 120
        %v224 = vpop.permute.xlu0 %223
        %225 = vrot.lane.b32.xlu0 %v206, 120
        %v226 = vpop.permute.xlu0 %225
        %227 = vrot.lane.b32.xlu0 %v207, 120
        %v228 = vpop.permute.xlu0 %227
        %229 = vrot.lane.b32.xlu0 %v208, 120
        %v230 = vpop.permute.xlu0 %229
        %231 = vrot.lane.b32.xlu0 %v209, 120
        %v232 = vpop.permute.xlu0 %231
        %233 = vrot.lane.b32.xlu0 %v210, 120
        %v234 = vpop.permute.xlu0 %233
        %243 = vrot.lane.b32.xlu0 %v203, 8
        %v244 = vpop.permute.xlu0 %243
        %245 = vrot.lane.b32.xlu0 %v204, 8
        %v246 = vpop.permute.xlu0 %245
        %247 = vrot.lane.b32.xlu0 %v205, 8
        %v248 = vpop.permute.xlu0 %247
        %249 = vrot.lane.b32.xlu0 %v206, 8
        %v250 = vpop.permute.xlu0 %249
        %251 = vrot.lane.b32.xlu0 %v207, 8
        %v252 = vpop.permute.xlu0 %251
        %253 = vrot.lane.b32.xlu0 %v208, 8
        %v254 = vpop.permute.xlu0 %253
        %255 = vrot.lane.b32.xlu0 %v209, 8
        %v256 = vpop.permute.xlu0 %255
        %257 = vrot.lane.b32.xlu0 %v210, 8
        %v258 = vpop.permute.xlu0 %257
        %vm267 = vcmask 64512
        %v268 = vsel %vm267, %v220, %v244
        %v269 = vsel %vm267, %v222, %v246
        %v270 = vsel %vm267, %v224, %v248
        %v271 = vsel %vm267, %v226, %v250
        %v272 = vsel %vm267, %v228, %v252
        %v273 = vsel %vm267, %v230, %v254
        %v274 = vsel %vm267, %v232, %v256
        %v275 = vsel %vm267, %v234, %v258
        %vm276 = vcmask 130048
        %277 = vst.msk [vmem:[%s188] sm:$0xff] %vm276, %v268
        %278 = vst.msk [vmem:[%s188 + $0x8] sm:$0xff] %vm276, %v269
        %279 = vst.msk [vmem:[%s188 + $0x10] sm:$0xff] %vm276, %v270
        %280 = vst.msk [vmem:[%s188 + $0x18] sm:$0xff] %vm276, %v271
        %281 = vst.msk [vmem:[%s188 + $0x20] sm:$0xff] %vm276, %v272
        %282 = vst.msk [vmem:[%s188 + $0x28] sm:$0xff] %vm276, %v273
        %283 = vst.msk [vmem:[%s188 + $0x30] sm:$0xff] %vm276, %v274
        %284 = vst.msk [vmem:[%s188 + $0x38] sm:$0xff] %vm276, %v275
        %s285 = sand.u32 %s92, 1
        %s286 = scalar_lea.sflag [#allocation4], %s285
        %s287 = sand.u32 %s92, 1
        %s288 = smul.addr %s287, 64
        %s289 = scalar_lea.vmem [#allocation5], %s288
        // Predicated region
        $region29: #{_cutperm_static.1} parent=23 // pred_check
          %p290 = pneg %p102
        $region30: #{_cutperm_static.1} parent=23 // pred_check_branch
          %292 = sbr.rel (%p290) target = $region32
        $region31: #{_cutperm_static.1} parent=23 // pred_region
          %s293 = smul.u32 2, %s22
          %s295 = ssub.s32 1024, 1024
          %296 = vsyncadd %s286, %s295
          %s297 = smul.addr %s293, 8
          %s298 = sadd.s32 %s23, %s297
          %s299 = smul.addr %s298, 128
          %s300 = scalar_lea.hbm %s1, %s299
          %s301 = sshll.u32 %s289, 4
          %s302 = int_to_ptr.vmem [resolvable:$true] %s301
          %307 = dma.vmem_to_hbm [thread:$0]  %s302, 1024, %s300, %s286, 128, 256, 8
        $region32: #{_cutperm_static.1} parent=23 // pred_fallthru
          _
      $region24: #{_cutperm_static.1} parent=5 // pred_fallthru
        _
      %p308 = scmp.le.s32.totalorder 2, %s13
      // Predicated region
      $region33: #{_cutperm_static.1} parent=5 // pred_check
        %p309 = pneg %p308
      $region34: #{_cutperm_static.1} parent=5 // pred_check_branch
        %311 = sbr.rel (%p309) target = $region36
      $region35: #{_cutperm_static.1} parent=5 // pred_region
        %s312 = ssub.s32 %s13, 2
        // Predicated region
        $region37: #{_cutperm_static.1} parent=35 // pred_check
          %p313 = pneg %p108
        $region38: #{_cutperm_static.1} parent=35 // pred_check_branch
          %315 = sbr.rel (%p313) target = $region40
        $region39: #{_cutperm_static.1} parent=35 // pred_region
          %s316 = sand.u32 %s93, 1
          %s317 = scalar_lea.sflag [#allocation4], %s316
          %s318 = sand.u32 %s93, 1
          %s319 = smul.addr %s318, 64
          %s320 = scalar_lea.vmem [#allocation5], %s319
          %321 = dma.done %s317, 1024
        $region40: #{_cutperm_static.1} parent=35 // pred_fallthru
          _
      $region36: #{_cutperm_static.1} parent=5 // pred_fallthru
        _
    $region6: #{_cutperm_static.1} parent=1 // loop_footer
      %s17 = sadd.s32 1, %s13
    $region7: #{_cutperm_static.1} parent=1 // loop_footer_branch
      %12 = sbr.rel target = $region3
    $region8: #{_cutperm_static.1} parent=1 // loop_exit
      _
    %322 = vsyncpa [#allocation3], 1
    %s323 = scalar_lea.sflag [#allocation3], 1
    %324 = vsyncpa %s323, 1
    %325 = vsyncpa [#allocation4], 1
    %s326 = scalar_lea.sflag [#allocation4], 1
    %327 = vsyncpa %s326, 1

</llo_original>
